<compile_context>
chip_gen: v7x
topology: tpu7x:2x2x1
jax: 0.10.0
libtpu: 0.0.40
codegen_flags: <defaults>
</compile_context>

<pallas_src>
import functools
import math

import jax
import jax.numpy as jnp
from jax import lax
from jax.experimental import pallas as pl
from jax.experimental.pallas import tpu as pltpu


def _gelu_tanh(x):
    # TODO(synk): PyTorch nn.GELU() defaults to the exact erf form; the tanh
    # approximation (used for guaranteed Mosaic lowering) differs by <1e-3.
    c = math.sqrt(2.0 / math.pi)
    return 0.5 * x * (1.0 + jnp.tanh(c * (x + 0.044715 * x * x * x)))


def _layer_norm(x, gamma, beta, eps):
    mu = jnp.mean(x, axis=-1, keepdims=True)
    xc = x - mu
    var = jnp.mean(xc * xc, axis=-1, keepdims=True)
    return xc * lax.rsqrt(var + eps) * gamma + beta


# ---------------------------------------------------------------------------
# Kernel 1: per-batch key/value projection, key softmax over the sequence axis,
#           and the (masked block-diagonal) linear-attention context (C, C).
# ---------------------------------------------------------------------------
def _kv_context_kernel(x_ref, wkv_ref, bkv_ref, mask_ref, ctx_ref, *, d_model):
    x = x_ref[0].astype(jnp.float32)                                   # (N, C)
    kv = jnp.dot(x, wkv_ref[...], preferred_element_type=jnp.float32) + bkv_ref[0]
    k = kv[:, :d_model]                                                # (N, C)
    v = kv[:, d_model:]                                                # (N, C)

    # softmax over the sequence axis (dim=-2 of (B,H,N,d_k)) == per-column over N
    cmax = jnp.max(k, axis=0, keepdims=True)
    ek = jnp.exp(k - cmax)
    k_sm = ek / jnp.sum(ek, axis=0, keepdims=True)

    # einsum('bhnd,bhne->bhde') == the diagonal (d_k x d_k) blocks of k_sm^T @ v
    ctx = jnp.dot(k_sm.T, v, preferred_element_type=jnp.float32)       # (C, C)
    ctx_ref[0] = ctx * mask_ref[...]                                   # keep per-head blocks


# ---------------------------------------------------------------------------
# Kernel 2: row-parallel part — query path, attention apply, output projection,
#           residual + LayerNorm1, feed-forward, residual + LayerNorm2.
# ---------------------------------------------------------------------------
def _row_block_kernel(x_ref, ctx_ref, mask_ref,
                      wq_ref, bq_ref, wo_ref, bo_ref,
                      w1_ref, b1_ref, w2_ref, b2_ref,
                      g1_ref, be1_ref, g2_ref, be2_ref,
                      o_ref, *, inv_sqrt_dk, eps):
    x = x_ref[0].astype(jnp.float32)                                   # (TN, C)
    ctx = ctx_ref[0]                                                   # (C, C)
    hm = mask_ref[...]                                                 # (C, C)

    # ---- multi-head linear attention: query path ----
    q = jnp.dot(x, wq_ref[...], preferred_element_type=jnp.float32) + bq_ref[0]
    rmax = jnp.max(q, axis=-1, keepdims=True)          # per-row max (valid stabilizer
    eq = jnp.exp(q - rmax)                             #  for every head segment)
    denom = jnp.dot(eq, hm, preferred_element_type=jnp.float32)  # per-head seg-sum, broadcast
    q_sm = eq / denom * inv_sqrt_dk                    # softmax(q, -1) / sqrt(d_k)

    attn = jnp.dot(q_sm, ctx, preferred_element_type=jnp.float32)      # (TN, C)
    y1 = jnp.dot(attn, wo_ref[...], preferred_element_type=jnp.float32) + bo_ref[0]

    # residual + LayerNorm1 (dropout1 = identity in eval)
    r1 = _layer_norm(x + y1, g1_ref[0], be1_ref[0], eps)

    # ---- feed-forward ----
    h = _gelu_tanh(jnp.dot(r1, w1_ref[...], preferred_element_type=jnp.float32)
                   + b1_ref[0])
    y2 = jnp.dot(h, w2_ref[...], preferred_element_type=jnp.float32) + b2_ref[0]

    out = _layer_norm(r1 + y2, g2_ref[0], be2_ref[0], eps)
    o_ref[0] = out.astype(o_ref.dtype)


# ---------------------------------------------------------------------------
# Wrapper
# ---------------------------------------------------------------------------
def self_attention_layer(x, params, *, nhead, eps=1e-6, seq_block=128):
    """x: (B, N, d_model) float32; params: dict of weights (in, out) layout."""
    B, N, C = x.shape
    dff = params["w1"].shape[1]
    assert C % nhead == 0
    dk = C // nhead

    tn = seq_block if (N % seq_block == 0) else N
    assert N % tn == 0 and tn % 8 == 0

    # Block-diagonal per-head mask (C, C): mask[i, j] = (head(i) == head(j)).
    hid = jnp.arange(C, dtype=jnp.int32) // dk
    head_mask = (hid[:, None] == hid[None, :]).astype(jnp.float32)

    wkv = jnp.concatenate([params["wk"], params["wv"]], axis=1)         # (C, 2C)
    bkv = jnp.concatenate([params["bk"], params["bv"]]).reshape(1, 2 * C)

    vmem_limit = 32 * 1024 * 1024   # tiles are <2 MiB; explicit + safe on v5e/v6e/v7x

    # ---- kernel 1: sequence-wide key softmax + linear-attention context ----
    ctx = pl.pallas_call(
        functools.partial(_kv_context_kernel, d_model=C),
        out_shape=jax.ShapeDtypeStruct((B, C, C), jnp.float32),
        grid_spec=pltpu.PrefetchScalarGridSpec(
            num_scalar_prefetch=0,
            grid=(B,),
            in_specs=[
                pl.BlockSpec((1, N, C), lambda b: (b, 0, 0)),
                pl.BlockSpec((C, 2 * C), lambda b: (0, 0)),
                pl.BlockSpec((1, 2 * C), lambda b: (0, 0)),
                pl.BlockSpec((C, C), lambda b: (0, 0)),
            ],
            out_specs=pl.BlockSpec((1, C, C), lambda b: (b, 0, 0)),
        ),
        compiler_params=pltpu.CompilerParams(
            dimension_semantics=("parallel",),
            vmem_limit_bytes=vmem_limit),
    )(x, wkv, bkv, head_mask)

    # ---- kernel 2: row-parallel attention apply + FFN + LayerNorms ----
    b2d = {k: params[k].reshape(1, -1)
           for k in ("bq", "bo", "b1", "b2", "g1", "beta1", "g2", "beta2")}

    out = pl.pallas_call(
        functools.partial(_row_block_kernel,
                          inv_sqrt_dk=1.0 / math.sqrt(dk), eps=eps),
        out_shape=jax.ShapeDtypeStruct((B, N, C), x.dtype),
        grid_spec=pltpu.PrefetchScalarGridSpec(
            num_scalar_prefetch=0,
            grid=(B, N // tn),
            in_specs=[
                pl.BlockSpec((1, tn, C), lambda b, i: (b, i, 0)),   # x tile
                pl.BlockSpec((1, C, C), lambda b, i: (b, 0, 0)),    # context
                pl.BlockSpec((C, C), lambda b, i: (0, 0)),          # head mask
                pl.BlockSpec((C, C), lambda b, i: (0, 0)),          # Wq
                pl.BlockSpec((1, C), lambda b, i: (0, 0)),          # bq
                pl.BlockSpec((C, C), lambda b, i: (0, 0)),          # Wo
                pl.BlockSpec((1, C), lambda b, i: (0, 0)),          # bo
                pl.BlockSpec((C, dff), lambda b, i: (0, 0)),        # W1
                pl.BlockSpec((1, dff), lambda b, i: (0, 0)),        # b1
                pl.BlockSpec((dff, C), lambda b, i: (0, 0)),        # W2
                pl.BlockSpec((1, C), lambda b, i: (0, 0)),          # b2
                pl.BlockSpec((1, C), lambda b, i: (0, 0)),          # ln1 gamma
                pl.BlockSpec((1, C), lambda b, i: (0, 0)),          # ln1 beta
                pl.BlockSpec((1, C), lambda b, i: (0, 0)),          # ln2 gamma
                pl.BlockSpec((1, C), lambda b, i: (0, 0)),          # ln2 beta
            ],
            out_specs=pl.BlockSpec((1, tn, C), lambda b, i: (b, i, 0)),
        ),
        compiler_params=pltpu.CompilerParams(
            dimension_semantics=("parallel", "parallel"),
            vmem_limit_bytes=vmem_limit),
    )(x, ctx, head_mask,
      params["wq"], b2d["bq"], params["wo"], b2d["bo"],
      params["w1"], b2d["b1"], params["w2"], b2d["b2"],
      b2d["g1"], b2d["beta1"], b2d["g2"], b2d["beta2"])
    return out


# ---------------------------------------------------------------------------
# Pure-JAX reference (mirrors the PyTorch module in eval mode, src_mask=None)
# ---------------------------------------------------------------------------
def _reference(x, params, *, nhead, eps=1e-6):
    B, N, C = x.shape
    dk = C // nhead
    with jax.default_matmul_precision("highest"):
        q = x @ params["wq"] + params["bq"]
        k = x @ params["wk"] + params["bk"]
        v = x @ params["wv"] + params["bv"]

        def split(t):
            return t.reshape(B, N, nhead, dk).transpose(0, 2, 1, 3)   # (B,H,N,dk)

        qh, kh, vh = split(q), split(k), split(v)
        qh = jax.nn.softmax(qh, axis=-1) / math.sqrt(dk)
        kh = jax.nn.softmax(kh, axis=-2)
        ctx = jnp.einsum("bhnd,bhne->bhde", kh, vh)
        oh = jnp.einsum("bhnd,bhde->bhne", qh, ctx)
        o = oh.transpose(0, 2, 1, 3).reshape(B, N, C)

        y1 = o @ params["wo"] + params["bo"]
        r1 = _layer_norm(x + y1, params["g1"], params["beta1"], eps)
        h = _gelu_tanh(r1 @ params["w1"] + params["b1"])
        y2 = h @ params["w2"] + params["b2"]
        return _layer_norm(r1 + y2, params["g2"], params["beta2"], eps)


if __name__ == "__main__":
    key = jax.random.PRNGKey(0)
    B, N, C, nhead, dff = 2, 256, 128, 4, 256   # lane-dense d_model / dim_feedforward

    keys = jax.random.split(key, 16)

    def lin(k, fan_in, shape):
        bound = 1.0 / math.sqrt(fan_in)
        return jax.random.uniform(k, shape, jnp.float32, -bound, bound)

    params = {
        "wq": lin(keys[0], C, (C, C)),   "bq": lin(keys[1], C, (C,)),
        "wk": lin(keys[2], C, (C, C)),   "bk": lin(keys[3], C, (C,)),
        "wv": lin(keys[4], C, (C, C)),   "bv": lin(keys[5], C, (C,)),
        "wo": lin(keys[6], C, (C, C)),   "bo": lin(keys[7], C, (C,)),
        "w1": lin(keys[8], C, (C, dff)), "b1": lin(keys[9], C, (dff,)),
        "w2": lin(keys[10], dff, (dff, C)), "b2": lin(keys[11], dff, (C,)),
        "g1": jnp.ones((C,), jnp.float32), "beta1": jnp.zeros((C,), jnp.float32),
        "g2": jnp.ones((C,), jnp.float32), "beta2": jnp.zeros((C,), jnp.float32),
    }
    x = jax.random.normal(keys[12], (B, N, C), dtype=jnp.float32)

    out = self_attention_layer(x, params, nhead=nhead)
    out = jax.block_until_ready(out)

    ref = _reference(x, params, nhead=nhead)
    assert out.shape == x.shape and out.dtype == x.dtype
    err = float(jnp.max(jnp.abs(out - ref)))
    assert jnp.allclose(out, ref, atol=2e-2, rtol=2e-2), f"max abs err {err}"
    print("KERNEL_OK")
</pallas_src>

<mosaic_0001>
module attributes {stable_mosaic.version = 11 : i64} {
  func.func @_kv_context_kernel(%arg0: i32, %arg1: memref<1x256x128xf32, #tpu.memory_space<vmem>>, %arg2: memref<128x256xf32, #tpu.memory_space<vmem>>, %arg3: memref<1x256xf32, #tpu.memory_space<vmem>>, %arg4: memref<128x128xf32, #tpu.memory_space<vmem>>, %arg5: memref<1x128x128xf32, #tpu.memory_space<vmem>>) attributes {dimension_semantics = [#tpu.dimension_semantics<parallel>], iteration_bounds = array<i64: 2>, scalar_prefetch = 0 : i64, scratch_operands = 0 : i64, tpu.core_type = #tpu.core_type<tc>, window_params = [{transform_indices = @transform_0, window_bounds = array<i64: 1, 256, 128>}, {pipeline_mode = #tpu.pipeline_mode<synchronous>, transform_indices = @transform_1, window_bounds = array<i64: 128, 256>}, {pipeline_mode = #tpu.pipeline_mode<synchronous>, transform_indices = @transform_2, window_bounds = array<i64: 1, 256>}, {pipeline_mode = #tpu.pipeline_mode<synchronous>, transform_indices = @transform_3, window_bounds = array<i64: 128, 128>}, {transform_indices = @transform_4, window_bounds = array<i64: 1, 128, 128>}]} {
    %c0 = arith.constant 0 : index
    %c0_0 = arith.constant 0 : index
    %c0_1 = arith.constant 0 : index
    %0 = vector.load %arg1[%c0, %c0_0, %c0_1] : memref<1x256x128xf32, #tpu.memory_space<vmem>>, vector<1x256x128xf32>
    %1 = vector.shape_cast %0 : vector<1x256x128xf32> to vector<256x128xf32>
    %c0_2 = arith.constant 0 : index
    %c0_3 = arith.constant 0 : index
    %2 = vector.load %arg2[%c0_2, %c0_3] : memref<128x256xf32, #tpu.memory_space<vmem>>, vector<128x256xf32>
    %cst = arith.constant dense<0.000000e+00> : vector<256x256xf32>
    %3 = tpu.matmul %1, %2, %cst {dimension_numbers = #tpu.dot_dimension_numbers<[1], [0], [0], [1], [0, 0, 1, 1], [], []>} : vector<256x128xf32>, vector<128x256xf32>, vector<256x256xf32> -> vector<256x256xf32>
    %c0_4 = arith.constant 0 : index
    %c0_5 = arith.constant 0 : index
    %4 = vector.load %arg3[%c0_4, %c0_5] : memref<1x256xf32, #tpu.memory_space<vmem>>, vector<1x256xf32>
    %5 = vector.shape_cast %4 : vector<1x256xf32> to vector<256xf32>
    %6 = vector.shape_cast %5 : vector<256xf32> to vector<1x256xf32>
    %7 = vector.broadcast %6 : vector<1x256xf32> to vector<256x256xf32>
    %8 = arith.addf %3, %7 : vector<256x256xf32>
    %9 = vector.extract_strided_slice %8 {offsets = [0, 0], sizes = [256, 128], strides = [1, 1]} : vector<256x256xf32> to vector<256x128xf32>
    %10 = vector.extract_strided_slice %8 {offsets = [0, 128], sizes = [256, 128], strides = [1, 1]} : vector<256x256xf32> to vector<256x128xf32>
    %cst_6 = arith.constant dense<0xFF800000> : vector<128xf32>
    %11 = vector.multi_reduction <maximumf>, %9, %cst_6 [0] : vector<256x128xf32> to vector<128xf32>
    %12 = vector.shape_cast %11 : vector<128xf32> to vector<1x128xf32>
    %13 = vector.broadcast %12 : vector<1x128xf32> to vector<256x128xf32>
    %14 = arith.subf %9, %13 : vector<256x128xf32>
    %15 = math.exp %14 : vector<256x128xf32>
    %cst_7 = arith.constant dense<0.000000e+00> : vector<128xf32>
    %16 = vector.multi_reduction <add>, %15, %cst_7 [0] : vector<256x128xf32> to vector<128xf32>
    %17 = vector.shape_cast %16 : vector<128xf32> to vector<1x128xf32>
    %18 = vector.broadcast %17 : vector<1x128xf32> to vector<256x128xf32>
    %19 = arith.divf %15, %18 : vector<256x128xf32>
    %20 = tpu.transpose %19, [1, 0] : vector<256x128xf32> -> vector<128x256xf32>
    %cst_8 = arith.constant dense<0.000000e+00> : vector<128x128xf32>
    %21 = tpu.matmul %20, %10, %cst_8 {dimension_numbers = #tpu.dot_dimension_numbers<[1], [0], [0], [1], [0, 0, 1, 1], [], []>} : vector<128x256xf32>, vector<256x128xf32>, vector<128x128xf32> -> vector<128x128xf32>
    %c0_9 = arith.constant 0 : index
    %c0_10 = arith.constant 0 : index
    %22 = vector.load %arg4[%c0_9, %c0_10] : memref<128x128xf32, #tpu.memory_space<vmem>>, vector<128x128xf32>
    %23 = arith.mulf %21, %22 : vector<128x128xf32>
    %c0_11 = arith.constant 0 : index
    %c0_12 = arith.constant 0 : index
    %c0_13 = arith.constant 0 : index
    %24 = vector.load %arg5[%c0_11, %c0_12, %c0_13] : memref<1x128x128xf32, #tpu.memory_space<vmem>>, vector<1x128x128xf32>
    %25 = vector.shape_cast %24 : vector<1x128x128xf32> to vector<128x128xf32>
    %26 = vector.shape_cast %23 : vector<128x128xf32> to vector<1x128x128xf32>
    tpu.vector_store %arg5[%c0_11, %c0_12, %c0_13], %26 {strides = array<i32>} : memref<1x128x128xf32, #tpu.memory_space<vmem>>, vector<1x128x128xf32>,
    return
  }
  func.func @transform_0(%arg0: i32) -> (i32, i32, i32) {
    %c0_i32 = arith.constant 0 : i32
    %c0_i32_0 = arith.constant 0 : i32
    %c0_i32_1 = arith.constant 0 : i32
    return %arg0, %c0_i32, %c0_i32_0 : i32, i32, i32
  }
  func.func @transform_1(%arg0: i32) -> (i32, i32) {
    %c0_i32 = arith.constant 0 : i32
    %c0_i32_0 = arith.constant 0 : i32
    %c0_i32_1 = arith.constant 0 : i32
    return %c0_i32, %c0_i32_0 : i32, i32
  }
  func.func @transform_2(%arg0: i32) -> (i32, i32) {
    %c0_i32 = arith.constant 0 : i32
    %c0_i32_0 = arith.constant 0 : i32
    %c0_i32_1 = arith.constant 0 : i32
    return %c0_i32, %c0_i32_0 : i32, i32
  }
  func.func @transform_3(%arg0: i32) -> (i32, i32) {
    %c0_i32 = arith.constant 0 : i32
    %c0_i32_0 = arith.constant 0 : i32
    %c0_i32_1 = arith.constant 0 : i32
    return %c0_i32, %c0_i32_0 : i32, i32
  }
  func.func @transform_4(%arg0: i32) -> (i32, i32, i32) {
    %c0_i32 = arith.constant 0 : i32
    %c0_i32_0 = arith.constant 0 : i32
    %c0_i32_1 = arith.constant 0 : i32
    return %arg0, %c0_i32, %c0_i32_0 : i32, i32, i32
  }
}

</mosaic_0001>

<llo_original>
// kernel: tpu_custom_call.1
$region0: #{tpu_custom_call.1}
  #allocation0 [shape = 'u32[]', space=smem, size = 0x4, offset = 0x4, fixed_abs, tag = 'smem constant byte address 0x4 - core index']
  #allocation1 [shape = 'u32[144,128]{1,0:T(1,128)}', space=vmem, size = 0x12000, scoped, tag = 'internal scratch']
  %s0 = inlined_call_operand.hbm [shape: f32[2,256,128], index: 0, kind: input, shape index: {}]
  %s1 = inlined_call_operand.hbm [shape: f32[128,256], index: 1, kind: input, shape index: {}]
  %s2 = inlined_call_operand.vmem [shape: f32[1,256], index: 2, kind: input, shape index: {}]
  %s3 = inlined_call_operand.hbm [shape: f32[128,128], index: 3, kind: input, shape index: {}]
  %s4 = inlined_call_operand.hbm [shape: f32[2,128,128], index: 4, kind: output, shape index: {}]
  %s5 = sld [smem:[#allocation0]]
  $region61: #{tpu_custom_call.1} parent=0
    _
  %s7 = ssub.s32 1, %s5
  %s8 = scalar_select 0, %s7, %s5
  $region1: #{tpu_custom_call.1} parent=0
    #allocation2 [shape = 'u8[262144]{0}', space=vmem, size = 0x40000, scoped, tag = 'input window, operand 0']
    #allocation3 [shape = 's32[2]{0}', space=sflag, size = 0x8, scoped, tag = 'scoped memory for tpu_custom_call.1']
    #allocation4 [shape = 's32[2]{0}', space=sflag, size = 0x8, scoped, tag = 'scoped memory for tpu_custom_call.1']
    #allocation5 [shape = 'u8[131072]{0}', space=vmem, size = 0x20000, scoped, tag = 'input window, operand 1, single buffered']
    #allocation6 [shape = 's32[1]{0}', space=sflag, size = 0x4, scoped, tag = 'scoped memory for tpu_custom_call.1']
    #allocation7 [shape = 'u8[65536]{0}', space=vmem, size = 0x10000, scoped, tag = 'input window, operand 3, single buffered']
    #allocation8 [shape = 'u8[131072]{0}', space=vmem, size = 0x20000, scoped, tag = 'output window, operand 0']
    %9 = vsyncpa [#allocation3], 0
    %s10 = scalar_lea.sflag [#allocation3], 1
    %11 = vsyncpa %s10, 0
    %12 = vsyncpa [#allocation6], 0
    %13 = vsyncpa [#allocation4], 0
    %s14 = scalar_lea.sflag [#allocation4], 1
    %15 = vsyncpa %s14, 0
    loop: start=0, step=1, limit=4
    $region2: #{tpu_custom_call.1} parent=1 // loop_pre_header
      _
    $region3: #{tpu_custom_call.1} parent=1 // loop_header
      %s17 = sphi 0, %s21
      %p18 = scmp.ge.s32.totalorder %s17, 4
      %s27 = sphi 0, %s29
      %s30 = sphi 0, %s27
      %s31 = sphi 0, %s30
      %s47 = sphi 0, %s31
      %s51 = sphi 0, %s51
      %s53 = sphi 0, %s51
      %s54 = sphi 0, %s53
      %s68 = sphi 0, %s54
      %s72 = sphi 0, %s72
      %s74 = sphi 0, %s72
      %s75 = sphi 0, %s74
      %s89 = sphi 0, %s75
      %s93 = sphi 0, %s93
      %s95 = sphi 0, %s93
      %s96 = sphi 0, %s95
      %s110 = sphi 0, %s96
      %s116 = sphi 0, %s118
      %s119 = sphi 0, %s116
      %s120 = sphi 0, %s119
      %s136 = sphi 0, %s120
    $region4: #{tpu_custom_call.1} parent=1 // loop_header_branch
      %20 = sbr.rel (%p18) target = $region8
    $region5: #{tpu_custom_call.1} parent=1 // loop_body
      %s22 = ssub.s32 %s17, 1
      %s23 = ssub.s32 %s17, 2
      %s24 = sadd.s32 %s17, 1
      %s25 = ssub.s32 %s17, %s24
      %p26 = scmp.eq.s32.totalorder %s25, 0
      %s28 = sadd.s32 %s27, 1
      %s29 = scalar_select %p26, %s27, %s28
      %p32 = pneg %p26
      %p33 = scmp.eq.s32.totalorder %s17, 1
      %p34 = por %p32, %p33
      %p35 = scmp.ne.s32.totalorder %s27, %s30
      %p36 = scmp.eq.s32.totalorder %s17, 0
      %p37 = por %p35, %p36
      %p38 = scmp.ne.s32.totalorder %s27, %s30
      %p39 = scmp.eq.s32.totalorder %s22, 1
      %p40 = por %p38, %p39
      %p41 = scmp.ne.s32.totalorder %s30, %s31
      %p42 = scmp.eq.s32.totalorder %s22, 0
      %p43 = por %p41, %p42
      %p44 = scmp.ne.s32.totalorder %s30, %s31
      %p45 = scmp.eq.s32.totalorder %s23, 1
      %p46 = por %p44, %p45
      %p48 = scmp.ne.s32.totalorder %s31, %s47
      %p49 = scmp.eq.s32.totalorder %s23, 0
      %p50 = por %p48, %p49
      %s52 = sadd.s32 %s51, 1
      %p55 = scmp.eq.s32.totalorder %s17, 1
      %p56 = scmp.ne.s32.totalorder %s51, %s53
      %p57 = scmp.eq.s32.totalorder %s17, 0
      %p58 = por %p56, %p57
      %p59 = scmp.ne.s32.totalorder %s51, %s53
      %p60 = scmp.eq.s32.totalorder %s22, 1
      %p61 = por %p59, %p60
      %p62 = scmp.ne.s32.totalorder %s53, %s54
      %p63 = scmp.eq.s32.totalorder %s22, 0
      %p64 = por %p62, %p63
      %p65 = scmp.ne.s32.totalorder %s53, %s54
      %p66 = scmp.eq.s32.totalorder %s23, 1
      %p67 = por %p65, %p66
      %p69 = scmp.ne.s32.totalorder %s54, %s68
      %p70 = scmp.eq.s32.totalorder %s23, 0
      %p71 = por %p69, %p70
      %s73 = sadd.s32 %s72, 1
      %p76 = scmp.eq.s32.totalorder %s17, 1
      %p77 = scmp.ne.s32.totalorder %s72, %s74
      %p78 = scmp.eq.s32.totalorder %s17, 0
      %p79 = por %p77, %p78
      %p80 = scmp.ne.s32.totalorder %s72, %s74
      %p81 = scmp.eq.s32.totalorder %s22, 1
      %p82 = por %p80, %p81
      %p83 = scmp.ne.s32.totalorder %s74, %s75
      %p84 = scmp.eq.s32.totalorder %s22, 0
      %p85 = por %p83, %p84
      %p86 = scmp.ne.s32.totalorder %s74, %s75
      %p87 = scmp.eq.s32.totalorder %s23, 1
      %p88 = por %p86, %p87
      %p90 = scmp.ne.s32.totalorder %s75, %s89
      %p91 = scmp.eq.s32.totalorder %s23, 0
      %p92 = por %p90, %p91
      %s94 = sadd.s32 %s93, 1
      %p97 = scmp.eq.s32.totalorder %s17, 1
      %p98 = scmp.ne.s32.totalorder %s93, %s95
      %p99 = scmp.eq.s32.totalorder %s17, 0
      %p100 = por %p98, %p99
      %p101 = scmp.ne.s32.totalorder %s93, %s95
      %p102 = scmp.eq.s32.totalorder %s22, 1
      %p103 = por %p101, %p102
      %p104 = scmp.ne.s32.totalorder %s95, %s96
      %p105 = scmp.eq.s32.totalorder %s22, 0
      %p106 = por %p104, %p105
      %p107 = scmp.ne.s32.totalorder %s95, %s96
      %p108 = scmp.eq.s32.totalorder %s23, 1
      %p109 = por %p107, %p108
      %p111 = scmp.ne.s32.totalorder %s96, %s110
      %p112 = scmp.eq.s32.totalorder %s23, 0
      %p113 = por %p111, %p112
      %s114 = ssub.s32 %s17, %s24
      %p115 = scmp.eq.s32.totalorder %s114, 0
      %s117 = sadd.s32 %s116, 1
      %s118 = scalar_select %p115, %s116, %s117
      %p121 = pneg %p115
      %p122 = scmp.eq.s32.totalorder %s17, 1
      %p123 = por %p121, %p122
      %p124 = scmp.ne.s32.totalorder %s116, %s119
      %p125 = scmp.eq.s32.totalorder %s17, 0
      %p126 = por %p124, %p125
      %p127 = scmp.ne.s32.totalorder %s116, %s119
      %p128 = scmp.eq.s32.totalorder %s22, 1
      %p129 = por %p127, %p128
      %p130 = scmp.ne.s32.totalorder %s119, %s120
      %p131 = scmp.eq.s32.totalorder %s22, 0
      %p132 = por %p130, %p131
      %p133 = scmp.ne.s32.totalorder %s119, %s120
      %p134 = scmp.eq.s32.totalorder %s23, 1
      %p135 = por %p133, %p134
      %p137 = scmp.ne.s32.totalorder %s120, %s136
      %p138 = scmp.eq.s32.totalorder %s23, 0
      %p139 = por %p137, %p138
      %p140 = scmp.le.s32.totalorder 1, %s17
      %p141 = scmp.lt.s32.totalorder %s17, 3
      %p142 = pnand %p140, %p141
      %p143 = pneg %p142
      // Predicated region
      $region9: #{tpu_custom_call.1} parent=5 // pred_check
        _
      $region10: #{tpu_custom_call.1} parent=5 // pred_check_branch
        %145 = sbr.rel (%p142) target = $region12
      $region11: #{tpu_custom_call.1} parent=5 // pred_region
        %s146 = ssub.s32 %s17, 1
        // Predicated region
        $region13: #{tpu_custom_call.1} parent=11 // pred_check
          %p147 = pneg %p64
        $region14: #{tpu_custom_call.1} parent=11 // pred_check_branch
          %149 = sbr.rel (%p147) target = $region16
        $region15: #{tpu_custom_call.1} parent=11 // pred_region
          %s151 = ssub.s32 4096, 4096
          %152 = vsyncadd [#allocation6], %s151
          %s153 = sshll.u32 [#allocation5], 4
          %s154 = int_to_ptr.vmem [resolvable:$true] %s153
          %159 = dma.hbm_to_vmem [thread:$0]  %s1, 4096, %s154, [#allocation6], 256, 256, 16
        $region16: #{tpu_custom_call.1} parent=11 // pred_fallthru
          _
        // Predicated region
        $region17: #{tpu_custom_call.1} parent=11 // pred_check
          %p160 = pneg %p85
        $region18: #{tpu_custom_call.1} parent=11 // pred_check_branch
          %162 = sbr.rel (%p160) target = $region20
        $region19: #{tpu_custom_call.1} parent=11 // pred_region
          _
        $region20: #{tpu_custom_call.1} parent=11 // pred_fallthru
          _
        // Predicated region
        $region21: #{tpu_custom_call.1} parent=11 // pred_check
          %p163 = pneg %p106
        $region22: #{tpu_custom_call.1} parent=11 // pred_check_branch
          %165 = sbr.rel (%p163) target = $region24
        $region23: #{tpu_custom_call.1} parent=11 // pred_region
          %s167 = ssub.s32 2048, 2048
          %168 = vsyncadd [#allocation6], %s167
          %s169 = sshll.u32 [#allocation7], 4
          %s170 = int_to_ptr.vmem [resolvable:$true] %s169
          %175 = dma.hbm_to_vmem [thread:$0]  %s3, 2048, %s170, [#allocation6], 128, 128, 8
        $region24: #{tpu_custom_call.1} parent=11 // pred_fallthru
          _
      $region12: #{tpu_custom_call.1} parent=5 // pred_fallthru
        _
      %p176 = scmp.lt.s32.totalorder %s17, 2
      // Predicated region
      $region25: #{tpu_custom_call.1} parent=5 // pred_check
        %p177 = pneg %p176
      $region26: #{tpu_custom_call.1} parent=5 // pred_check_branch
        %179 = sbr.rel (%p177) target = $region28
      $region27: #{tpu_custom_call.1} parent=5 // pred_region
        // Predicated region
        $region29: #{tpu_custom_call.1} parent=27 // pred_check
          %p180 = pneg %p37
        $region30: #{tpu_custom_call.1} parent=27 // pred_check_branch
          %182 = sbr.rel (%p180) target = $region32
        $region31: #{tpu_custom_call.1} parent=27 // pred_region
          %s183 = sand.u32 %s27, 1
          %s184 = scalar_lea.sflag [#allocation3], %s183
          %s185 = sand.u32 %s27, 1
          %s186 = smul.addr %s185, 256
          %s187 = scalar_lea.vmem [#allocation2], %s186
          %s189 = ssub.s32 4096, 4096
          %190 = vsyncadd %s184, %s189
          %s191 = smul.addr %s17, 32
          %s192 = smul.addr %s191, 128
          %s193 = scalar_lea.hbm %s0, %s192
          %s194 = sshll.u32 %s187, 4
          %s195 = int_to_ptr.vmem [resolvable:$true] %s194
          %200 = dma.hbm_to_vmem [thread:$0]  %s193, 4096, %s195, %s184, 128, 128, 8
        $region32: #{tpu_custom_call.1} parent=27 // pred_fallthru
          _
      $region28: #{tpu_custom_call.1} parent=5 // pred_fallthru
        _
      %p201 = scmp.le.s32.totalorder 1, %s17
      %p202 = scmp.lt.s32.totalorder %s17, 3
      %p203 = pnand %p201, %p202
      %p204 = pneg %p203
      // Predicated region
      $region33: #{tpu_custom_call.1} parent=5 // pred_check
        _
      $region34: #{tpu_custom_call.1} parent=5 // pred_check_branch
        %206 = sbr.rel (%p203) target = $region36
      $region35: #{tpu_custom_call.1} parent=5 // pred_region
        %s207 = ssub.s32 %s17, 1
        %s208 = sand.u32 %s30, 1
        %s209 = scalar_lea.sflag [#allocation3], %s208
        %s210 = sand.u32 %s30, 1
        %s211 = smul.addr %s210, 256
        %s212 = scalar_lea.vmem [#allocation2], %s211
        // Predicated region
        $region37: #{tpu_custom_call.1} parent=35 // pred_check
          %p213 = pneg %p43
        $region38: #{tpu_custom_call.1} parent=35 // pred_check_branch
          %215 = sbr.rel (%p213) target = $region40
        $region39: #{tpu_custom_call.1} parent=35 // pred_region
          %216 = dma.done %s209, 4096
        $region40: #{tpu_custom_call.1} parent=35 // pred_fallthru
          _
        // Predicated region
        $region41: #{tpu_custom_call.1} parent=35 // pred_check
          %p217 = pneg %p64
        $region42: #{tpu_custom_call.1} parent=35 // pred_check_branch
          %219 = sbr.rel (%p217) target = $region44
        $region43: #{tpu_custom_call.1} parent=35 // pred_region
          %220 = dma.done [#allocation6], 4096
        $region44: #{tpu_custom_call.1} parent=35 // pred_fallthru
          _
        // Predicated region
        $region45: #{tpu_custom_call.1} parent=35 // pred_check
          %p221 = pneg %p106
        $region46: #{tpu_custom_call.1} parent=35 // pred_check_branch
          %223 = sbr.rel (%p221) target = $region48
        $region47: #{tpu_custom_call.1} parent=35 // pred_region
          %224 = dma.done [#allocation6], 2048
        $region48: #{tpu_custom_call.1} parent=35 // pred_fallthru
          _
        %s225 = sand.u32 %s30, 1
        %s226 = scalar_lea.sflag [#allocation3], %s225
        %s227 = sand.u32 %s30, 1
        %s228 = smul.addr %s227, 256
        %s229 = scalar_lea.vmem [#allocation2], %s228
        %p230 = pneg %p43
        %p231 = pneg %p40
        %p232 = pneg %p64
        %p233 = pneg %p61
        %p234 = pneg %p85
        %p235 = pneg %p82
        %p236 = pneg %p106
        %p237 = pneg %p103
        %p238 = pneg %p132
        %p239 = pneg %p129
        %s240 = sand.u32 %s119, 1
        %s241 = scalar_lea.sflag [#allocation4], %s240
        %s242 = sand.u32 %s119, 1
        %s243 = smul.addr %s242, 128
        %s244 = scalar_lea.vmem [#allocation8], %s243
        %v245 = vld [vmem:[%s212] sm:$0xff]
        %v246 = vld [vmem:[%s212 + $0x8] sm:$0xff]
        %v247 = vld [vmem:[%s212 + $0x10] sm:$0xff]
        %v248 = vld [vmem:[%s212 + $0x18] sm:$0xff]
        %v249 = vld [vmem:[%s212 + $0x20] sm:$0xff]
        %v250 = vld [vmem:[%s212 + $0x28] sm:$0xff]
        %v251 = vld [vmem:[%s212 + $0x30] sm:$0xff]
        %v252 = vld [vmem:[%s212 + $0x38] sm:$0xff]
        %v253 = vld [vmem:[%s212 + $0x40] sm:$0xff]
        %v254 = vld [vmem:[%s212 + $0x48] sm:$0xff]
        %v255 = vld [vmem:[%s212 + $0x50] sm:$0xff]
        %v256 = vld [vmem:[%s212 + $0x58] sm:$0xff]
        %v257 = vld [vmem:[%s212 + $0x60] sm:$0xff]
        %v258 = vld [vmem:[%s212 + $0x68] sm:$0xff]
        %v259 = vld [vmem:[%s212 + $0x70] sm:$0xff]
        %v260 = vld [vmem:[%s212 + $0x78] sm:$0xff]
        %v261 = vld [vmem:[%s212 + $0x80] sm:$0xff]
        %v262 = vld [vmem:[%s212 + $0x88] sm:$0xff]
        %v263 = vld [vmem:[%s212 + $0x90] sm:$0xff]
        %v264 = vld [vmem:[%s212 + $0x98] sm:$0xff]
        %v265 = vld [vmem:[%s212 + $0xa0] sm:$0xff]
        %v266 = vld [vmem:[%s212 + $0xa8] sm:$0xff]
        %v267 = vld [vmem:[%s212 + $0xb0] sm:$0xff]
        %v268 = vld [vmem:[%s212 + $0xb8] sm:$0xff]
        %v269 = vld [vmem:[%s212 + $0xc0] sm:$0xff]
        %v270 = vld [vmem:[%s212 + $0xc8] sm:$0xff]
        %v271 = vld [vmem:[%s212 + $0xd0] sm:$0xff]
        %v272 = vld [vmem:[%s212 + $0xd8] sm:$0xff]
        %v273 = vld [vmem:[%s212 + $0xe0] sm:$0xff]
        %v274 = vld [vmem:[%s212 + $0xe8] sm:$0xff]
        %v275 = vld [vmem:[%s212 + $0xf0] sm:$0xff]
        %v276 = vld [vmem:[%s212 + $0xf8] sm:$0xff]
        %v277 = vld [vmem:[#allocation5] sm:$0xff]
        %v278 = vld [vmem:[#allocation5 + $0x8] sm:$0xff]
        %v279 = vld [vmem:[#allocation5 + $0x10] sm:$0xff]
        %v280 = vld [vmem:[#allocation5 + $0x18] sm:$0xff]
        %v281 = vld [vmem:[#allocation5 + $0x20] sm:$0xff]
        %v282 = vld [vmem:[#allocation5 + $0x28] sm:$0xff]
        %v283 = vld [vmem:[#allocation5 + $0x30] sm:$0xff]
        %v284 = vld [vmem:[#allocation5 + $0x38] sm:$0xff]
        %v285 = vld [vmem:[#allocation5 + $0x40] sm:$0xff]
        %v286 = vld [vmem:[#allocation5 + $0x48] sm:$0xff]
        %v287 = vld [vmem:[#allocation5 + $0x50] sm:$0xff]
        %v288 = vld [vmem:[#allocation5 + $0x58] sm:$0xff]
        %v289 = vld [vmem:[#allocation5 + $0x60] sm:$0xff]
        %v290 = vld [vmem:[#allocation5 + $0x68] sm:$0xff]
        %v291 = vld [vmem:[#allocation5 + $0x70] sm:$0xff]
        %v292 = vld [vmem:[#allocation5 + $0x78] sm:$0xff]
        %v293 = vld [vmem:[#allocation5 + $0x80] sm:$0xff]
        %v294 = vld [vmem:[#allocation5 + $0x88] sm:$0xff]
        %v295 = vld [vmem:[#allocation5 + $0x90] sm:$0xff]
        %v296 = vld [vmem:[#allocation5 + $0x98] sm:$0xff]
        %v297 = vld [vmem:[#allocation5 + $0xa0] sm:$0xff]
        %v298 = vld [vmem:[#allocation5 + $0xa8] sm:$0xff]
        %v299 = vld [vmem:[#allocation5 + $0xb0] sm:$0xff]
        %v300 = vld [vmem:[#allocation5 + $0xb8] sm:$0xff]
        %v301 = vld [vmem:[#allocation5 + $0xc0] sm:$0xff]
        %v302 = vld [vmem:[#allocation5 + $0xc8] sm:$0xff]
        %v303 = vld [vmem:[#allocation5 + $0xd0] sm:$0xff]
        %v304 = vld [vmem:[#allocation5 + $0xd8] sm:$0xff]
        %v305 = vld [vmem:[#allocation5 + $0xe0] sm:$0xff]
        %v306 = vld [vmem:[#allocation5 + $0xe8] sm:$0xff]
        %v307 = vld [vmem:[#allocation5 + $0xf0] sm:$0xff]
        %v308 = vld [vmem:[#allocation5 + $0xf8] sm:$0xff]
        %v309 = vld [vmem:[%s2] sm:$0x3]
        %v311 = vlaneseq
        %v312 = vshrl.u32 %v311, 7
        %v313 = vsub.s32 0, %v312
        %v314 = vrot.slane %v309, %v313
        %v315 = vlaneseq
        %v316 = vshrl.u32 %v315, 7
        %v317 = vsub.s32 1, %v316
        %v318 = vrot.slane %v309, %v317
        %321 = vmatprep.subr.mxu0 %v278
        %322 = vmatpush1.msra.mxu0 %v277
        %323 = vmatprep.subr.mxu0 %v280
        %324 = vmatpush1.msra.mxu0 %v279
        %325 = vmatprep.subr.mxu0 %v282
        %326 = vmatpush1.msra.mxu0 %v281
        %327 = vmatprep.subr.mxu0 %v284
        %328 = vmatpush1.msra.mxu0 %v283
        %329 = vmatprep.subr.mxu0 %v286
        %330 = vmatpush1.msra.mxu0 %v285
        %331 = vmatprep.subr.mxu0 %v288
        %332 = vmatpush1.msra.mxu0 %v287
        %333 = vmatprep.subr.mxu0 %v290
        %334 = vmatpush1.msra.mxu0 %v289
        %335 = vmatprep.subr.mxu0 %v292
        %336 = vmatpush1.msra.mxu0 %v291
        %337 = vmatprep.subr.mxu0 %v294
        %338 = vmatpush1.msra.mxu0 %v293
        %339 = vmatprep.subr.mxu0 %v296
        %340 = vmatpush1.msra.mxu0 %v295
        %341 = vmatprep.subr.mxu0 %v298
        %342 = vmatpush1.msra.mxu0 %v297
        %343 = vmatprep.subr.mxu0 %v300
        %344 = vmatpush1.msra.mxu0 %v299
        %345 = vmatprep.subr.mxu0 %v302
        %346 = vmatpush1.msra.mxu0 %v301
        %347 = vmatprep.subr.mxu0 %v304
        %348 = vmatpush1.msra.mxu0 %v303
        %349 = vmatprep.subr.mxu0 %v306
        %350 = vmatpush1.msra.mxu0 %v305
        %351 = vmatprep.subr.mxu0 %v308
        %352 = vmatpush1.msra.mxu0 %v307
        %353 = vmatprep.subr.mxu0 0.0
        %354 = vmatpush1.msra.mxu0 0.0
        %355 = vmatprep.subr.mxu0 0.0
        %356 = vmatpush1.msra.mxu0 0.0
        %357 = vmatprep.subr.mxu0 0.0
        %358 = vmatpush1.msra.mxu0 0.0
        %359 = vmatprep.subr.mxu0 0.0
        %360 = vmatpush1.msra.mxu0 0.0
        %361 = vmatprep.subr.mxu0 0.0
        %362 = vmatpush1.msra.mxu0 0.0
        %363 = vmatprep.subr.mxu0 0.0
        %364 = vmatpush1.msra.mxu0 0.0
        %365 = vmatprep.subr.mxu0 0.0
        %366 = vmatpush1.msra.mxu0 0.0
        %367 = vmatprep.subr.mxu0 0.0
        %368 = vmatpush1.msra.mxu0 0.0
        %369 = vmatprep.subr.mxu0 0.0
        %370 = vmatpush1.msra.mxu0 0.0
        %371 = vmatprep.subr.mxu0 0.0
        %372 = vmatpush1.msra.mxu0 0.0
        %373 = vmatprep.subr.mxu0 0.0
        %374 = vmatpush1.msra.mxu0 0.0
        %375 = vmatprep.subr.mxu0 0.0
        %376 = vmatpush1.msra.mxu0 0.0
        %377 = vmatprep.subr.mxu0 0.0
        %378 = vmatpush1.msra.mxu0 0.0
        %379 = vmatprep.subr.mxu0 0.0
        %380 = vmatpush1.msra.mxu0 0.0
        %381 = vmatprep.subr.mxu0 0.0
        %382 = vmatpush1.msra.mxu0 0.0
        %383 = vmatprep.subr.mxu0 0.0
        %384 = vmatpush1.msra.mxu0 0.0
        %385 = vmatprep.mubr.f32.mxu0 0.0
        %386 = vmatmul.mubr.f32.gmra.mrb[0].mxu0 %v245
        %v387 = vpop.f32.mrb[0].mxu0
        %v388 = vadd.f32 %v314, %v387
        %v389 = vpop.f32.mrb[0].mxu0
        %v390 = vadd.f32 %v318, %v389
        %391 = vmatprep.mubr.f32.mxu0 0.0
        %392 = vmatmul.mubr.f32.gmra.mrb[0].mxu0 %v246
        %v393 = vpop.f32.mrb[0].mxu0
        %v394 = vadd.f32 %v314, %v393
        %v395 = vpop.f32.mrb[0].mxu0
        %v396 = vadd.f32 %v318, %v395
        %397 = vmatprep.mubr.f32.mxu0 0.0
        %398 = vmatmul.mubr.f32.gmra.mrb[0].mxu0 %v247
        %v399 = vpop.f32.mrb[0].mxu0
        %v400 = vadd.f32 %v314, %v399
        %v401 = vpop.f32.mrb[0].mxu0
        %v402 = vadd.f32 %v318, %v401
        %403 = vmatprep.mubr.f32.mxu0 0.0
        %404 = vmatmul.mubr.f32.gmra.mrb[0].mxu0 %v248
        %v405 = vpop.f32.mrb[0].mxu0
        %v406 = vadd.f32 %v314, %v405
        %v407 = vpop.f32.mrb[0].mxu0
        %v408 = vadd.f32 %v318, %v407
        %409 = vmatprep.mubr.f32.mxu0 0.0
        %410 = vmatmul.mubr.f32.gmra.mrb[0].mxu0 %v249
        %v411 = vpop.f32.mrb[0].mxu0
        %v412 = vadd.f32 %v314, %v411
        %v413 = vpop.f32.mrb[0].mxu0
        %v414 = vadd.f32 %v318, %v413
        %415 = vmatprep.mubr.f32.mxu0 0.0
        %416 = vmatmul.mubr.f32.gmra.mrb[0].mxu0 %v250
        %v417 = vpop.f32.mrb[0].mxu0
        %v418 = vadd.f32 %v314, %v417
        %v419 = vpop.f32.mrb[0].mxu0
        %v420 = vadd.f32 %v318, %v419
        %421 = vmatprep.mubr.f32.mxu0 0.0
        %422 = vmatmul.mubr.f32.gmra.mrb[0].mxu0 %v251
        %v423 = vpop.f32.mrb[0].mxu0
        %v424 = vadd.f32 %v314, %v423
        %v425 = vpop.f32.mrb[0].mxu0
        %v426 = vadd.f32 %v318, %v425
        %427 = vmatprep.mubr.f32.mxu0 0.0
        %428 = vmatmul.mubr.f32.gmra.mrb[0].mxu0 %v252
        %v429 = vpop.f32.mrb[0].mxu0
        %v430 = vadd.f32 %v314, %v429
        %v431 = vpop.f32.mrb[0].mxu0
        %v432 = vadd.f32 %v318, %v431
        %433 = vmatprep.mubr.f32.mxu0 0.0
        %434 = vmatmul.mubr.f32.gmra.mrb[0].mxu0 %v253
        %v435 = vpop.f32.mrb[0].mxu0
        %v436 = vadd.f32 %v314, %v435
        %v437 = vpop.f32.mrb[0].mxu0
        %v438 = vadd.f32 %v318, %v437
        %439 = vmatprep.mubr.f32.mxu0 0.0
        %440 = vmatmul.mubr.f32.gmra.mrb[0].mxu0 %v254
        %v441 = vpop.f32.mrb[0].mxu0
        %v442 = vadd.f32 %v314, %v441
        %v443 = vpop.f32.mrb[0].mxu0
        %v444 = vadd.f32 %v318, %v443
        %445 = vmatprep.mubr.f32.mxu0 0.0
        %446 = vmatmul.mubr.f32.gmra.mrb[0].mxu0 %v255
        %v447 = vpop.f32.mrb[0].mxu0
        %v448 = vadd.f32 %v314, %v447
        %v449 = vpop.f32.mrb[0].mxu0
        %v450 = vadd.f32 %v318, %v449
        %451 = vmatprep.mubr.f32.mxu0 0.0
        %452 = vmatmul.mubr.f32.gmra.mrb[0].mxu0 %v256
        %v453 = vpop.f32.mrb[0].mxu0
        %v454 = vadd.f32 %v314, %v453
        %v455 = vpop.f32.mrb[0].mxu0
        %v456 = vadd.f32 %v318, %v455
        %457 = vmatprep.mubr.f32.mxu0 0.0
        %458 = vmatmul.mubr.f32.gmra.mrb[0].mxu0 %v257
        %v459 = vpop.f32.mrb[0].mxu0
        %v460 = vadd.f32 %v314, %v459
        %v461 = vpop.f32.mrb[0].mxu0
        %v462 = vadd.f32 %v318, %v461
        %463 = vmatprep.mubr.f32.mxu0 0.0
        %464 = vmatmul.mubr.f32.gmra.mrb[0].mxu0 %v258
        %v465 = vpop.f32.mrb[0].mxu0
        %v466 = vadd.f32 %v314, %v465
        %v467 = vpop.f32.mrb[0].mxu0
        %v468 = vadd.f32 %v318, %v467
        %469 = vmatprep.mubr.f32.mxu0 0.0
        %470 = vmatmul.mubr.f32.gmra.mrb[0].mxu0 %v259
        %v471 = vpop.f32.mrb[0].mxu0
        %v472 = vadd.f32 %v314, %v471
        %v473 = vpop.f32.mrb[0].mxu0
        %v474 = vadd.f32 %v318, %v473
        %475 = vmatprep.mubr.f32.mxu0 0.0
        %476 = vmatmul.mubr.f32.gmra.mrb[0].mxu0 %v260
        %v477 = vpop.f32.mrb[0].mxu0
        %v478 = vadd.f32 %v314, %v477
        %v479 = vpop.f32.mrb[0].mxu0
        %v480 = vadd.f32 %v318, %v479
        %481 = vmatprep.mubr.f32.mxu0 0.0
        %482 = vmatmul.mubr.f32.gmra.mrb[0].mxu0 %v261
        %v483 = vpop.f32.mrb[0].mxu0
        %v484 = vadd.f32 %v314, %v483
        %v485 = vpop.f32.mrb[0].mxu0
        %v486 = vadd.f32 %v318, %v485
        %487 = vmatprep.mubr.f32.mxu0 0.0
        %488 = vmatmul.mubr.f32.gmra.mrb[0].mxu0 %v262
        %v489 = vpop.f32.mrb[0].mxu0
        %v490 = vadd.f32 %v314, %v489
        %v491 = vpop.f32.mrb[0].mxu0
        %v492 = vadd.f32 %v318, %v491
        %493 = vmatprep.mubr.f32.mxu0 0.0
        %494 = vmatmul.mubr.f32.gmra.mrb[0].mxu0 %v263
        %v495 = vpop.f32.mrb[0].mxu0
        %v496 = vadd.f32 %v314, %v495
        %v497 = vpop.f32.mrb[0].mxu0
        %v498 = vadd.f32 %v318, %v497
        %499 = vmatprep.mubr.f32.mxu0 0.0
        %500 = vmatmul.mubr.f32.gmra.mrb[0].mxu0 %v264
        %v501 = vpop.f32.mrb[0].mxu0
        %v502 = vadd.f32 %v314, %v501
        %v503 = vpop.f32.mrb[0].mxu0
        %v504 = vadd.f32 %v318, %v503
        %505 = vmatprep.mubr.f32.mxu0 0.0
        %506 = vmatmul.mubr.f32.gmra.mrb[0].mxu0 %v265
        %v507 = vpop.f32.mrb[0].mxu0
        %v508 = vadd.f32 %v314, %v507
        %v509 = vpop.f32.mrb[0].mxu0
        %v510 = vadd.f32 %v318, %v509
        %511 = vmatprep.mubr.f32.mxu0 0.0
        %512 = vmatmul.mubr.f32.gmra.mrb[0].mxu0 %v266
        %v513 = vpop.f32.mrb[0].mxu0
        %v514 = vadd.f32 %v314, %v513
        %v515 = vpop.f32.mrb[0].mxu0
        %v516 = vadd.f32 %v318, %v515
        %517 = vmatprep.mubr.f32.mxu0 0.0
        %518 = vmatmul.mubr.f32.gmra.mrb[0].mxu0 %v267
        %v519 = vpop.f32.mrb[0].mxu0
        %v520 = vadd.f32 %v314, %v519
        %v521 = vpop.f32.mrb[0].mxu0
        %v522 = vadd.f32 %v318, %v521
        %523 = vmatprep.mubr.f32.mxu0 0.0
        %524 = vmatmul.mubr.f32.gmra.mrb[0].mxu0 %v268
        %v525 = vpop.f32.mrb[0].mxu0
        %v526 = vadd.f32 %v314, %v525
        %v527 = vpop.f32.mrb[0].mxu0
        %v528 = vadd.f32 %v318, %v527
        %529 = vmatprep.mubr.f32.mxu0 0.0
        %530 = vmatmul.mubr.f32.gmra.mrb[0].mxu0 %v269
        %v531 = vpop.f32.mrb[0].mxu0
        %v532 = vadd.f32 %v314, %v531
        %v533 = vpop.f32.mrb[0].mxu0
        %v534 = vadd.f32 %v318, %v533
        %535 = vmatprep.mubr.f32.mxu0 0.0
        %536 = vmatmul.mubr.f32.gmra.mrb[0].mxu0 %v270
        %v537 = vpop.f32.mrb[0].mxu0
        %v538 = vadd.f32 %v314, %v537
        %v539 = vpop.f32.mrb[0].mxu0
        %v540 = vadd.f32 %v318, %v539
        %541 = vmatprep.mubr.f32.mxu0 0.0
        %542 = vmatmul.mubr.f32.gmra.mrb[0].mxu0 %v271
        %v543 = vpop.f32.mrb[0].mxu0
        %v544 = vadd.f32 %v314, %v543
        %v545 = vpop.f32.mrb[0].mxu0
        %v546 = vadd.f32 %v318, %v545
        %547 = vmatprep.mubr.f32.mxu0 0.0
        %548 = vmatmul.mubr.f32.gmra.mrb[0].mxu0 %v272
        %v549 = vpop.f32.mrb[0].mxu0
        %v550 = vadd.f32 %v314, %v549
        %v551 = vpop.f32.mrb[0].mxu0
        %v552 = vadd.f32 %v318, %v551
        %553 = vmatprep.mubr.f32.mxu0 0.0
        %554 = vmatmul.mubr.f32.gmra.mrb[0].mxu0 %v273
        %v555 = vpop.f32.mrb[0].mxu0
        %v556 = vadd.f32 %v314, %v555
        %v557 = vpop.f32.mrb[0].mxu0
        %v558 = vadd.f32 %v318, %v557
        %559 = vmatprep.mubr.f32.mxu0 0.0
        %560 = vmatmul.mubr.f32.gmra.mrb[0].mxu0 %v274
        %v561 = vpop.f32.mrb[0].mxu0
        %v562 = vadd.f32 %v314, %v561
        %v563 = vpop.f32.mrb[0].mxu0
        %v564 = vadd.f32 %v318, %v563
        %565 = vmatprep.mubr.f32.mxu0 0.0
        %566 = vmatmul.mubr.f32.gmra.mrb[0].mxu0 %v275
        %v567 = vpop.f32.mrb[0].mxu0
        %v568 = vadd.f32 %v314, %v567
        %v569 = vpop.f32.mrb[0].mxu0
        %v570 = vadd.f32 %v318, %v569
        %571 = vmatprep.mubr.f32.mxu0 0.0
        %572 = vmatmul.mubr.f32.gmra.mrb[0].mxu0 %v276
        %v573 = vpop.f32.mrb[0].mxu0
        %v574 = vadd.f32 %v314, %v573
        %v575 = vpop.f32.mrb[0].mxu0
        %v576 = vadd.f32 %v318, %v575
        %577 = vdwg.mxu0
        %v578 = vmax.f32 %v388, %v412
        %v579 = vmax.f32 %v394, %v418
        %v580 = vmax.f32 %v400, %v424
        %v581 = vmax.f32 %v406, %v430
        %v582 = vmax.f32 %v578, %v436
        %v583 = vmax.f32 %v579, %v442
        %v584 = vmax.f32 %v580, %v448
        %v585 = vmax.f32 %v581, %v454
        %v586 = vmax.f32 %v582, %v460
        %v587 = vmax.f32 %v583, %v466
        %v588 = vmax.f32 %v584, %v472
        %v589 = vmax.f32 %v585, %v478
        %v590 = vmax.f32 %v586, %v484
        %v591 = vmax.f32 %v587, %v490
        %v592 = vmax.f32 %v588, %v496
        %v593 = vmax.f32 %v589, %v502
        %v594 = vmax.f32 %v590, %v508
        %v595 = vmax.f32 %v591, %v514
        %v596 = vmax.f32 %v592, %v520
        %v597 = vmax.f32 %v593, %v526
        %v598 = vmax.f32 %v594, %v532
        %v599 = vmax.f32 %v595, %v538
        %v600 = vmax.f32 %v596, %v544
        %v601 = vmax.f32 %v597, %v550
        %v602 = vmax.f32 %v598, %v556
        %v603 = vmax.f32 %v599, %v562
        %v604 = vmax.f32 %v600, %v568
        %v605 = vmax.f32 %v601, %v574
        %v606 = vmax.f32 %v602, %v603
        %v607 = vmax.f32 %v604, %v605
        %v608 = vmax.f32 %v606, %v607
        %v609 = vrot.slane %v608, 4
        %v610 = vmax.f32 %v608, %v609
        %v611 = vrot.slane %v610, 2
        %v612 = vmax.f32 %v610, %v611
        %v613 = vrot.slane %v612, 1
        %v614 = vmax.f32 %v612, %v613
        %v615 = vsub.f32 %v388, %v614
        %v616 = vsub.f32 %v394, %v614
        %v617 = vsub.f32 %v400, %v614
        %v618 = vsub.f32 %v406, %v614
        %v619 = vsub.f32 %v412, %v614
        %v620 = vsub.f32 %v418, %v614
        %v621 = vsub.f32 %v424, %v614
        %v622 = vsub.f32 %v430, %v614
        %v623 = vsub.f32 %v436, %v614
        %v624 = vsub.f32 %v442, %v614
        %v625 = vsub.f32 %v448, %v614
        %v626 = vsub.f32 %v454, %v614
        %v627 = vsub.f32 %v460, %v614
        %v628 = vsub.f32 %v466, %v614
        %v629 = vsub.f32 %v472, %v614
        %v630 = vsub.f32 %v478, %v614
        %v631 = vsub.f32 %v484, %v614
        %v632 = vsub.f32 %v490, %v614
        %v633 = vsub.f32 %v496, %v614
        %v634 = vsub.f32 %v502, %v614
        %v635 = vsub.f32 %v508, %v614
        %v636 = vsub.f32 %v514, %v614
        %v637 = vsub.f32 %v520, %v614
        %v638 = vsub.f32 %v526, %v614
        %v639 = vsub.f32 %v532, %v614
        %v640 = vsub.f32 %v538, %v614
        %v641 = vsub.f32 %v544, %v614
        %v642 = vsub.f32 %v550, %v614
        %v643 = vsub.f32 %v556, %v614
        %v644 = vsub.f32 %v562, %v614
        %v645 = vsub.f32 %v568, %v614
        %v646 = vsub.f32 %v574, %v614
        %v647 = vmul.f32 %v615, 1.442695
        %v648 = vpow.pop %v647
        %v649 = vmul.f32 %v616, 1.442695
        %v650 = vpow.pop %v649
        %v651 = vmul.f32 %v617, 1.442695
        %v652 = vpow.pop %v651
        %v653 = vmul.f32 %v618, 1.442695
        %v654 = vpow.pop %v653
        %v655 = vmul.f32 %v619, 1.442695
        %v656 = vpow.pop %v655
        %v657 = vmul.f32 %v620, 1.442695
        %v658 = vpow.pop %v657
        %v659 = vmul.f32 %v621, 1.442695
        %v660 = vpow.pop %v659
        %v661 = vmul.f32 %v622, 1.442695
        %v662 = vpow.pop %v661
        %v663 = vmul.f32 %v623, 1.442695
        %v664 = vpow.pop %v663
        %v665 = vmul.f32 %v624, 1.442695
        %v666 = vpow.pop %v665
        %v667 = vmul.f32 %v625, 1.442695
        %v668 = vpow.pop %v667
        %v669 = vmul.f32 %v626, 1.442695
        %v670 = vpow.pop %v669
        %v671 = vmul.f32 %v627, 1.442695
        %v672 = vpow.pop %v671
        %v673 = vmul.f32 %v628, 1.442695
        %v674 = vpow.pop %v673
        %v675 = vmul.f32 %v629, 1.442695
        %v676 = vpow.pop %v675
        %v677 = vmul.f32 %v630, 1.442695
        %v678 = vpow.pop %v677
        %v679 = vmul.f32 %v631, 1.442695
        %v680 = vpow.pop %v679
        %v681 = vmul.f32 %v632, 1.442695
        %v682 = vpow.pop %v681
        %v683 = vmul.f32 %v633, 1.442695
        %v684 = vpow.pop %v683
        %v685 = vmul.f32 %v634, 1.442695
        %v686 = vpow.pop %v685
        %v687 = vmul.f32 %v635, 1.442695
        %v688 = vpow.pop %v687
        %v689 = vmul.f32 %v636, 1.442695
        %v690 = vpow.pop %v689
        %v691 = vmul.f32 %v637, 1.442695
        %v692 = vpow.pop %v691
        %v693 = vmul.f32 %v638, 1.442695
        %v694 = vpow.pop %v693
        %v695 = vmul.f32 %v639, 1.442695
        %v696 = vpow.pop %v695
        %v697 = vmul.f32 %v640, 1.442695
        %v698 = vpow.pop %v697
        %v699 = vmul.f32 %v641, 1.442695
        %v700 = vpow.pop %v699
        %v701 = vmul.f32 %v642, 1.442695
        %v702 = vpow.pop %v701
        %v703 = vmul.f32 %v643, 1.442695
        %v704 = vpow.pop %v703
        %v705 = vmul.f32 %v644, 1.442695
        %v706 = vpow.pop %v705
        %v707 = vmul.f32 %v645, 1.442695
        %v708 = vpow.pop %v707
        %v709 = vmul.f32 %v646, 1.442695
        %v710 = vpow.pop %v709
        %v711 = vadd.f32 %v648, %v650
        %v712 = vadd.f32 %v711, %v652
        %v713 = vadd.f32 %v712, %v654
        %v714 = vadd.f32 %v713, %v656
        %v715 = vadd.f32 %v714, %v658
        %v716 = vadd.f32 %v715, %v660
        %v717 = vadd.f32 %v716, %v662
        %v718 = vadd.f32 %v717, %v664
        %v719 = vadd.f32 %v718, %v666
        %v720 = vadd.f32 %v719, %v668
        %v721 = vadd.f32 %v720, %v670
        %v722 = vadd.f32 %v721, %v672
        %v723 = vadd.f32 %v722, %v674
        %v724 = vadd.f32 %v723, %v676
        %v725 = vadd.f32 %v724, %v678
        %v726 = vadd.f32 %v725, %v680
        %v727 = vadd.f32 %v726, %v682
        %v728 = vadd.f32 %v727, %v684
        %v729 = vadd.f32 %v728, %v686
        %v730 = vadd.f32 %v729, %v688
        %v731 = vadd.f32 %v730, %v690
        %v732 = vadd.f32 %v731, %v692
        %v733 = vadd.f32 %v732, %v694
        %v734 = vadd.f32 %v733, %v696
        %v735 = vadd.f32 %v734, %v698
        %v736 = vadd.f32 %v735, %v700
        %v737 = vadd.f32 %v736, %v702
        %v738 = vadd.f32 %v737, %v704
        %v739 = vadd.f32 %v738, %v706
        %v740 = vadd.f32 %v739, %v708
        %v741 = vadd.f32 %v740, %v710
        %v742 = vrot.slane %v741, 4
        %v743 = vadd.f32 %v741, %v742
        %v744 = vrot.slane %v743, 2
        %v745 = vadd.f32 %v743, %v744
        %v746 = vrot.slane %v745, 1
        %v747 = vadd.f32 %v745, %v746
        %v748 = vrcp.pop %v747
        %v749 = vmul.f32 %v648, %v748
        %v750 = vmul.f32 %v650, %v748
        %v751 = vmul.f32 %v652, %v748
        %v752 = vmul.f32 %v654, %v748
        %v753 = vmul.f32 %v656, %v748
        %v754 = vmul.f32 %v658, %v748
        %v755 = vmul.f32 %v660, %v748
        %v756 = vmul.f32 %v662, %v748
        %v757 = vmul.f32 %v664, %v748
        %v758 = vmul.f32 %v666, %v748
        %v759 = vmul.f32 %v668, %v748
        %v760 = vmul.f32 %v670, %v748
        %v761 = vmul.f32 %v672, %v748
        %v762 = vmul.f32 %v674, %v748
        %v763 = vmul.f32 %v676, %v748
        %v764 = vmul.f32 %v678, %v748
        %v765 = vmul.f32 %v680, %v748
        %v766 = vmul.f32 %v682, %v748
        %v767 = vmul.f32 %v684, %v748
        %v768 = vmul.f32 %v686, %v748
        %v769 = vmul.f32 %v688, %v748
        %v770 = vmul.f32 %v690, %v748
        %v771 = vmul.f32 %v692, %v748
        %v772 = vmul.f32 %v694, %v748
        %v773 = vmul.f32 %v696, %v748
        %v774 = vmul.f32 %v698, %v748
        %v775 = vmul.f32 %v700, %v748
        %v776 = vmul.f32 %v702, %v748
        %v777 = vmul.f32 %v704, %v748
        %v778 = vmul.f32 %v706, %v748
        %v779 = vmul.f32 %v708, %v748
        %v780 = vmul.f32 %v710, %v748
        %781 = vxpose.xlu0.b32.start [1/16] %v749, 128
        %782 = vxpose.xlu0.b32.cont [2/16] %v750, 128
        %783 = vxpose.xlu0.b32.cont [3/16] %v751, 128
        %784 = vxpose.xlu0.b32.cont [4/16] %v752, 128
        %785 = vxpose.xlu0.b32.cont [5/16] %v753, 128
        %786 = vxpose.xlu0.b32.cont [6/16] %v754, 128
        %787 = vxpose.xlu0.b32.cont [7/16] %v755, 128
        %788 = vxpose.xlu0.b32.cont [8/16] %v756, 128
        %789 = vxpose.xlu0.b32.cont [9/16] %v757, 128
        %790 = vxpose.xlu0.b32.cont [10/16] %v758, 128
        %791 = vxpose.xlu0.b32.cont [11/16] %v759, 128
        %792 = vxpose.xlu0.b32.cont [12/16] %v760, 128
        %793 = vxpose.xlu0.b32.cont [13/16] %v761, 128
        %794 = vxpose.xlu0.b32.cont [14/16] %v762, 128
        %795 = vxpose.xlu0.b32.cont [15/16] %v763, 128
        %796 = vxpose.xlu0.b32.end [16/16] %v764, 128
        %v797 = vpop.trf.xlu0
        %v798 = vpop.trf.xlu0
        %v799 = vpop.trf.xlu0
        %v800 = vpop.trf.xlu0
        %v801 = vpop.trf.xlu0
        %v802 = vpop.trf.xlu0
        %v803 = vpop.trf.xlu0
        %v804 = vpop.trf.xlu0
        %v805 = vpop.trf.xlu0
        %v806 = vpop.trf.xlu0
        %v807 = vpop.trf.xlu0
        %v808 = vpop.trf.xlu0
        %v809 = vpop.trf.xlu0
        %v810 = vpop.trf.xlu0
        %v811 = vpop.trf.xlu0
        %v812 = vpop.trf.xlu0
        %813 = vxpose.xlu0.b32.start [1/16] %v765, 128
        %814 = vxpose.xlu0.b32.cont [2/16] %v766, 128
        %815 = vxpose.xlu0.b32.cont [3/16] %v767, 128
        %816 = vxpose.xlu0.b32.cont [4/16] %v768, 128
        %817 = vxpose.xlu0.b32.cont [5/16] %v769, 128
        %818 = vxpose.xlu0.b32.cont [6/16] %v770, 128
        %819 = vxpose.xlu0.b32.cont [7/16] %v771, 128
        %820 = vxpose.xlu0.b32.cont [8/16] %v772, 128
        %821 = vxpose.xlu0.b32.cont [9/16] %v773, 128
        %822 = vxpose.xlu0.b32.cont [10/16] %v774, 128
        %823 = vxpose.xlu0.b32.cont [11/16] %v775, 128
        %824 = vxpose.xlu0.b32.cont [12/16] %v776, 128
        %825 = vxpose.xlu0.b32.cont [13/16] %v777, 128
        %826 = vxpose.xlu0.b32.cont [14/16] %v778, 128
        %827 = vxpose.xlu0.b32.cont [15/16] %v779, 128
        %828 = vxpose.xlu0.b32.end [16/16] %v780, 128
        %v829 = vpop.trf.xlu0
        %v830 = vpop.trf.xlu0
        %v831 = vpop.trf.xlu0
        %v832 = vpop.trf.xlu0
        %v833 = vpop.trf.xlu0
        %v834 = vpop.trf.xlu0
        %v835 = vpop.trf.xlu0
        %v836 = vpop.trf.xlu0
        %v837 = vpop.trf.xlu0
        %v838 = vpop.trf.xlu0
        %v839 = vpop.trf.xlu0
        %v840 = vpop.trf.xlu0
        %v841 = vpop.trf.xlu0
        %v842 = vpop.trf.xlu0
        %v843 = vpop.trf.xlu0
        %v844 = vpop.trf.xlu0
        %845 = vmatprep.subr.mxu0 0.0
        %846 = vmatpush1.msra.mxu0 %v390
        %847 = vmatprep.subr.mxu0 0.0
        %848 = vmatpush1.msra.mxu0 %v396
        %849 = vmatprep.subr.mxu0 0.0
        %850 = vmatpush1.msra.mxu0 %v402
        %851 = vmatprep.subr.mxu0 0.0
        %852 = vmatpush1.msra.mxu0 %v408
        %853 = vmatprep.subr.mxu0 0.0
        %854 = vmatpush1.msra.mxu0 %v414
        %855 = vmatprep.subr.mxu0 0.0
        %856 = vmatpush1.msra.mxu0 %v420
        %857 = vmatprep.subr.mxu0 0.0
        %858 = vmatpush1.msra.mxu0 %v426
        %859 = vmatprep.subr.mxu0 0.0
        %860 = vmatpush1.msra.mxu0 %v432
        %861 = vmatprep.subr.mxu0 0.0
        %862 = vmatpush1.msra.mxu0 %v438
        %863 = vmatprep.subr.mxu0 0.0
        %864 = vmatpush1.msra.mxu0 %v444
        %865 = vmatprep.subr.mxu0 0.0
        %866 = vmatpush1.msra.mxu0 %v450
        %867 = vmatprep.subr.mxu0 0.0
        %868 = vmatpush1.msra.mxu0 %v456
        %869 = vmatprep.subr.mxu0 0.0
        %870 = vmatpush1.msra.mxu0 %v462
        %871 = vmatprep.subr.mxu0 0.0
        %872 = vmatpush1.msra.mxu0 %v468
        %873 = vmatprep.subr.mxu0 0.0
        %874 = vmatpush1.msra.mxu0 %v474
        %875 = vmatprep.subr.mxu0 0.0
        %876 = vmatpush1.msra.mxu0 %v480
        %877 = vmatprep.subr.mxu0 0.0
        %878 = vmatpush1.msra.mxu0 %v486
        %879 = vmatprep.subr.mxu0 0.0
        %880 = vmatpush1.msra.mxu0 %v492
        %881 = vmatprep.subr.mxu0 0.0
        %882 = vmatpush1.msra.mxu0 %v498
        %883 = vmatprep.subr.mxu0 0.0
        %884 = vmatpush1.msra.mxu0 %v504
        %885 = vmatprep.subr.mxu0 0.0
        %886 = vmatpush1.msra.mxu0 %v510
        %887 = vmatprep.subr.mxu0 0.0
        %888 = vmatpush1.msra.mxu0 %v516
        %889 = vmatprep.subr.mxu0 0.0
        %890 = vmatpush1.msra.mxu0 %v522
        %891 = vmatprep.subr.mxu0 0.0
        %892 = vmatpush1.msra.mxu0 %v528
        %893 = vmatprep.subr.mxu0 0.0
        %894 = vmatpush1.msra.mxu0 %v534
        %895 = vmatprep.subr.mxu0 0.0
        %896 = vmatpush1.msra.mxu0 %v540
        %897 = vmatprep.subr.mxu0 0.0
        %898 = vmatpush1.msra.mxu0 %v546
        %899 = vmatprep.subr.mxu0 0.0
        %900 = vmatpush1.msra.mxu0 %v552
        %901 = vmatprep.subr.mxu0 0.0
        %902 = vmatpush1.msra.mxu0 %v558
        %903 = vmatprep.subr.mxu0 0.0
        %904 = vmatpush1.msra.mxu0 %v564
        %905 = vmatprep.subr.mxu0 0.0
        %906 = vmatpush1.msra.mxu0 %v570
        %907 = vmatprep.subr.mxu0 0.0
        %908 = vmatpush1.msra.mxu0 %v576
        %909 = vmatprep.mubr.f32.mxu0 %v829
        %910 = vmatmul.mubr.f32.gmra.mrb[0].mxu0 %v797
        %v911 = vpop.f32.mrb[0].mxu0
        %v912 = vadd.f32 0.0, %v911
        %v913 = vpop.f32.mrb[0].mxu0
        %914 = vmatprep.mubr.f32.mxu0 %v830
        %915 = vmatmul.mubr.f32.gmra.mrb[0].mxu0 %v798
        %v916 = vpop.f32.mrb[0].mxu0
        %v917 = vadd.f32 0.0, %v916
        %v918 = vpop.f32.mrb[0].mxu0
        %919 = vmatprep.mubr.f32.mxu0 %v831
        %920 = vmatmul.mubr.f32.gmra.mrb[0].mxu0 %v799
        %v921 = vpop.f32.mrb[0].mxu0
        %v922 = vadd.f32 0.0, %v921
        %v923 = vpop.f32.mrb[0].mxu0
        %924 = vmatprep.mubr.f32.mxu0 %v832
        %925 = vmatmul.mubr.f32.gmra.mrb[0].mxu0 %v800
        %v926 = vpop.f32.mrb[0].mxu0
        %v927 = vadd.f32 0.0, %v926
        %v928 = vpop.f32.mrb[0].mxu0
        %929 = vmatprep.mubr.f32.mxu0 %v833
        %930 = vmatmul.mubr.f32.gmra.mrb[0].mxu0 %v801
        %v931 = vpop.f32.mrb[0].mxu0
        %v932 = vadd.f32 0.0, %v931
        %v933 = vpop.f32.mrb[0].mxu0
        %934 = vmatprep.mubr.f32.mxu0 %v834
        %935 = vmatmul.mubr.f32.gmra.mrb[0].mxu0 %v802
        %v936 = vpop.f32.mrb[0].mxu0
        %v937 = vadd.f32 0.0, %v936
        %v938 = vpop.f32.mrb[0].mxu0
        %939 = vmatprep.mubr.f32.mxu0 %v835
        %940 = vmatmul.mubr.f32.gmra.mrb[0].mxu0 %v803
        %v941 = vpop.f32.mrb[0].mxu0
        %v942 = vadd.f32 0.0, %v941
        %v943 = vpop.f32.mrb[0].mxu0
        %944 = vmatprep.mubr.f32.mxu0 %v836
        %945 = vmatmul.mubr.f32.gmra.mrb[0].mxu0 %v804
        %v946 = vpop.f32.mrb[0].mxu0
        %v947 = vadd.f32 0.0, %v946
        %v948 = vpop.f32.mrb[0].mxu0
        %949 = vmatprep.mubr.f32.mxu0 %v837
        %950 = vmatmul.mubr.f32.gmra.mrb[0].mxu0 %v805
        %v951 = vpop.f32.mrb[0].mxu0
        %v952 = vadd.f32 0.0, %v951
        %v953 = vpop.f32.mrb[0].mxu0
        %954 = vmatprep.mubr.f32.mxu0 %v838
        %955 = vmatmul.mubr.f32.gmra.mrb[0].mxu0 %v806
        %v956 = vpop.f32.mrb[0].mxu0
        %v957 = vadd.f32 0.0, %v956
        %v958 = vpop.f32.mrb[0].mxu0
        %959 = vmatprep.mubr.f32.mxu0 %v839
        %960 = vmatmul.mubr.f32.gmra.mrb[0].mxu0 %v807
        %v961 = vpop.f32.mrb[0].mxu0
        %v962 = vadd.f32 0.0, %v961
        %v963 = vpop.f32.mrb[0].mxu0
        %964 = vmatprep.mubr.f32.mxu0 %v840
        %965 = vmatmul.mubr.f32.gmra.mrb[0].mxu0 %v808
        %v966 = vpop.f32.mrb[0].mxu0
        %v967 = vadd.f32 0.0, %v966
        %v968 = vpop.f32.mrb[0].mxu0
        %969 = vmatprep.mubr.f32.mxu0 %v841
        %970 = vmatmul.mubr.f32.gmra.mrb[0].mxu0 %v809
        %v971 = vpop.f32.mrb[0].mxu0
        %v972 = vadd.f32 0.0, %v971
        %v973 = vpop.f32.mrb[0].mxu0
        %974 = vmatprep.mubr.f32.mxu0 %v842
        %975 = vmatmul.mubr.f32.gmra.mrb[0].mxu0 %v810
        %v976 = vpop.f32.mrb[0].mxu0
        %v977 = vadd.f32 0.0, %v976
        %v978 = vpop.f32.mrb[0].mxu0
        %979 = vmatprep.mubr.f32.mxu0 %v843
        %980 = vmatmul.mubr.f32.gmra.mrb[0].mxu0 %v811
        %v981 = vpop.f32.mrb[0].mxu0
        %v982 = vadd.f32 0.0, %v981
        %v983 = vpop.f32.mrb[0].mxu0
        %984 = vmatprep.mubr.f32.mxu0 %v844
        %985 = vmatmul.mubr.f32.gmra.mrb[0].mxu0 %v812
        %v986 = vpop.f32.mrb[0].mxu0
        %v987 = vadd.f32 0.0, %v986
        %v988 = vpop.f32.mrb[0].mxu0
        %989 = vdwg.mxu0
        %v990 = vld [vmem:[#allocation7] sm:$0xff]
        %v991 = vld [vmem:[#allocation7 + $0x8] sm:$0xff]
        %v992 = vld [vmem:[#allocation7 + $0x10] sm:$0xff]
        %v993 = vld [vmem:[#allocation7 + $0x18] sm:$0xff]
        %v994 = vld [vmem:[#allocation7 + $0x20] sm:$0xff]
        %v995 = vld [vmem:[#allocation7 + $0x28] sm:$0xff]
        %v996 = vld [vmem:[#allocation7 + $0x30] sm:$0xff]
        %v997 = vld [vmem:[#allocation7 + $0x38] sm:$0xff]
        %v998 = vld [vmem:[#allocation7 + $0x40] sm:$0xff]
        %v999 = vld [vmem:[#allocation7 + $0x48] sm:$0xff]
        %v1000 = vld [vmem:[#allocation7 + $0x50] sm:$0xff]
        %v1001 = vld [vmem:[#allocation7 + $0x58] sm:$0xff]
        %v1002 = vld [vmem:[#allocation7 + $0x60] sm:$0xff]
        %v1003 = vld [vmem:[#allocation7 + $0x68] sm:$0xff]
        %v1004 = vld [vmem:[#allocation7 + $0x70] sm:$0xff]
        %v1005 = vld [vmem:[#allocation7 + $0x78] sm:$0xff]
        %v1006 = vmul.f32 %v912, %v990
        %v1007 = vmul.f32 %v917, %v991
        %v1008 = vmul.f32 %v922, %v992
        %v1009 = vmul.f32 %v927, %v993
        %v1010 = vmul.f32 %v932, %v994
        %v1011 = vmul.f32 %v937, %v995
        %v1012 = vmul.f32 %v942, %v996
        %v1013 = vmul.f32 %v947, %v997
        %v1014 = vmul.f32 %v952, %v998
        %v1015 = vmul.f32 %v957, %v999
        %v1016 = vmul.f32 %v962, %v1000
        %v1017 = vmul.f32 %v967, %v1001
        %v1018 = vmul.f32 %v972, %v1002
        %v1019 = vmul.f32 %v977, %v1003
        %v1020 = vmul.f32 %v982, %v1004
        %v1021 = vmul.f32 %v987, %v1005
        %1022 = vst [vmem:[%s244] sm:$0xff] %v1006
        %1023 = vst [vmem:[%s244 + $0x8] sm:$0xff] %v1007
        %1024 = vst [vmem:[%s244 + $0x10] sm:$0xff] %v1008
        %1025 = vst [vmem:[%s244 + $0x18] sm:$0xff] %v1009
        %1026 = vst [vmem:[%s244 + $0x20] sm:$0xff] %v1010
        %1027 = vst [vmem:[%s244 + $0x28] sm:$0xff] %v1011
        %1028 = vst [vmem:[%s244 + $0x30] sm:$0xff] %v1012
        %1029 = vst [vmem:[%s244 + $0x38] sm:$0xff] %v1013
        %1030 = vst [vmem:[%s244 + $0x40] sm:$0xff] %v1014
        %1031 = vst [vmem:[%s244 + $0x48] sm:$0xff] %v1015
        %1032 = vst [vmem:[%s244 + $0x50] sm:$0xff] %v1016
        %1033 = vst [vmem:[%s244 + $0x58] sm:$0xff] %v1017
        %1034 = vst [vmem:[%s244 + $0x60] sm:$0xff] %v1018
        %1035 = vst [vmem:[%s244 + $0x68] sm:$0xff] %v1019
        %1036 = vst [vmem:[%s244 + $0x70] sm:$0xff] %v1020
        %1037 = vst [vmem:[%s244 + $0x78] sm:$0xff] %v1021
        %s1038 = sand.u32 %s119, 1
        %s1039 = scalar_lea.sflag [#allocation4], %s1038
        %s1040 = sand.u32 %s119, 1
        %s1041 = smul.addr %s1040, 128
        %s1042 = scalar_lea.vmem [#allocation8], %s1041
        // Predicated region
        $region49: #{tpu_custom_call.1} parent=35 // pred_check
          %p1043 = pneg %p129
        $region50: #{tpu_custom_call.1} parent=35 // pred_check_branch
          %1045 = sbr.rel (%p1043) target = $region52
        $region51: #{tpu_custom_call.1} parent=35 // pred_region
          %s1047 = ssub.s32 2048, 2048
          %1048 = vsyncadd %s1039, %s1047
          %s1049 = smul.addr %s22, 16
          %s1050 = smul.addr %s1049, 128
          %s1051 = scalar_lea.hbm %s4, %s1050
          %s1052 = sshll.u32 %s1042, 4
          %s1053 = int_to_ptr.vmem [resolvable:$true] %s1052
          %1058 = dma.vmem_to_hbm [thread:$0]  %s1053, 2048, %s1051, %s1039, 128, 128, 8
        $region52: #{tpu_custom_call.1} parent=35 // pred_fallthru
          _
      $region36: #{tpu_custom_call.1} parent=5 // pred_fallthru
        _
      %p1059 = scmp.le.s32.totalorder 2, %s17
      // Predicated region
      $region53: #{tpu_custom_call.1} parent=5 // pred_check
        %p1060 = pneg %p1059
      $region54: #{tpu_custom_call.1} parent=5 // pred_check_branch
        %1062 = sbr.rel (%p1060) target = $region56
      $region55: #{tpu_custom_call.1} parent=5 // pred_region
        %s1063 = ssub.s32 %s17, 2
        // Predicated region
        $region57: #{tpu_custom_call.1} parent=55 // pred_check
          %p1064 = pneg %p135
        $region58: #{tpu_custom_call.1} parent=55 // pred_check_branch
          %1066 = sbr.rel (%p1064) target = $region60
        $region59: #{tpu_custom_call.1} parent=55 // pred_region
          %s1067 = sand.u32 %s120, 1
          %s1068 = scalar_lea.sflag [#allocation4], %s1067
          %s1069 = sand.u32 %s120, 1
          %s1070 = smul.addr %s1069, 128
          %s1071 = scalar_lea.vmem [#allocation8], %s1070
          %1072 = dma.done %s1068, 2048
        $region60: #{tpu_custom_call.1} parent=55 // pred_fallthru
          _
      $region56: #{tpu_custom_call.1} parent=5 // pred_fallthru
        _
    $region6: #{tpu_custom_call.1} parent=1 // loop_footer
      %s21 = sadd.s32 1, %s17
    $region7: #{tpu_custom_call.1} parent=1 // loop_footer_branch
      %16 = sbr.rel target = $region3
    $region8: #{tpu_custom_call.1} parent=1 // loop_exit
      _
    %1073 = vsyncpa [#allocation3], 1
    %s1074 = scalar_lea.sflag [#allocation3], 1
    %1075 = vsyncpa %s1074, 1
    %1076 = vsyncpa [#allocation6], 1
    %1077 = vsyncpa [#allocation4], 1
    %s1078 = scalar_lea.sflag [#allocation4], 1
    %1079 = vsyncpa %s1078, 1

</llo_original>
